<compile_context>
chip_gen: v7x
topology: tpu7x:2x2x1
jax: 0.10.0
libtpu: 0.0.40
codegen_flags: <defaults>
</compile_context>

<pallas_src>
import functools

import jax
import jax.numpy as jnp
from jax.experimental import pallas as pl
from jax.experimental.pallas import tpu as pltpu


def _round_up(n, m):
    return ((n + m - 1) // m) * m


def _bike_kernel(inv_temperature, compute_dtype,
                 x_ref,
                 w1, b1, w2, b2, w3, b3, w4, b4, w5, b5,
                 logits_ref, probs_ref):
    x = x_ref[...]  # already in compute_dtype (cast in the wrapper)

    def layer(h, w, b):
        # Linear (+folded eval-mode BatchNorm) -> ReLU.
        y = jnp.dot(h, w[...], preferred_element_type=jnp.float32) + b[...]
        return jnp.maximum(y, 0.0)

    # fc1..fc4 (+folded bn1..bn4) -> relu.  Dropout(p=0.001) after layers 2
    # and 3 is identity at inference.  In bf16 mode the activations are cast
    # back to bf16 before each MXU pass; accumulation is always f32.
    h = layer(x, w1, b1)
    h = layer(h.astype(compute_dtype), w2, b2)
    h = layer(h.astype(compute_dtype), w3, b3)
    h = layer(h.astype(compute_dtype), w4, b4)

    # fc5 -> logits (kept in f32 for tolerance; padded class lanes get the
    # -1e30 sentinel from b5 and are sliced off in the wrapper).
    logits = jnp.dot(h, w5[...], preferred_element_type=jnp.float32) + b5[...]
    logits_ref[...] = logits

    # Numerically stable softmax over the (lane-dense, padded) class axis.
    # Padded lanes: exp(-huge - m) == 0, so they drop out of the sum.
    z = logits * inv_temperature
    m = jnp.max(z, axis=-1, keepdims=True)
    e = jnp.exp(z - m)
    denom = jnp.sum(e, axis=-1, keepdims=True)
    probs_ref[...] = e * pl.reciprocal(denom, approx=False)


def bike_model_forward(x, params, temperature=1.0, block_b=1024,
                       use_bf16=False):
    """x: (B, input_dim) float32. params: dict of weights/biases/BN params.

    Returns (logits, probs), both (B, num_classes) float32.
    """
    B, input_dim = x.shape
    num_classes = params["w5"].shape[1]
    eps = 1e-5  # PyTorch BatchNorm1d default
    compute_dtype = jnp.bfloat16 if use_bf16 else jnp.float32

    # ---- host-side fold of BatchNorm (eval) into the preceding Linear ------
    # y = ((x@w + b) - mean) * gamma/sqrt(var+eps) + beta
    #   = x @ (w*scale) + ((b - mean)*scale + beta)
    def folded_layer(i):
        w, b = params[f"w{i}"], params[f"b{i}"]
        scale = params[f"bn{i}_gamma"] / jnp.sqrt(params[f"bn{i}_var"] + eps)
        w_f = w * scale[None, :]
        b_f = (b - params[f"bn{i}_mean"]) * scale + params[f"bn{i}_beta"]
        return w_f, b_f[None, :]

    weight_inputs = []
    for i in (1, 2, 3, 4):
        w_f, b_f = folded_layer(i)
        # Matmul operands in compute_dtype; bias added post-accumulation in f32.
        weight_inputs += [w_f.astype(compute_dtype), b_f]

    # ---- lane-dense class dimension ----------------------------------------
    # Pad classes to a multiple of 128 lanes: zero columns in w5, -1e30
    # sentinel bias entries so padded lanes produce exp(.)==0 in softmax.
    C_pad = _round_up(num_classes, 128)
    w5 = params["w5"]
    b5 = params["b5"]
    if C_pad != num_classes:
        w5 = jnp.pad(w5, ((0, 0), (0, C_pad - num_classes)))
        b5 = jnp.concatenate(
            [b5, jnp.full((C_pad - num_classes,), -1e30, jnp.float32)])
    weight_inputs += [w5, b5[None, :]]  # fc5 stays f32

    # ---- batch tiling -------------------------------------------------------
    # >= 2 grid steps whenever the batch allows it (both v7x TensorCores get
    # work on the "parallel" axis); tile capped at block_b (~512-1024 rows is
    # where pipeline efficiency saturates).
    B8 = _round_up(max(B, 1), 8)
    TB = min(block_b, _round_up((B8 + 1) // 2, 8))
    TB = max(TB, 8)
    B_pad = _round_up(B8, TB)
    if B_pad != B:
        x = jnp.pad(x, ((0, B_pad - B), (0, 0)))  # zero rows; sliced off below
    x = x.astype(compute_dtype)
    grid = (B_pad // TB,)

    x_spec = pl.BlockSpec((TB, input_dim), lambda i: (i, 0))
    # Weights/biases: full-array blocks, constant index_map -> VMEM-resident
    # across all batch tiles.
    weight_specs = [pl.BlockSpec(w.shape, lambda i: (0, 0))
                    for w in weight_inputs]
    out_specs = (pl.BlockSpec((TB, C_pad), lambda i: (i, 0)),
                 pl.BlockSpec((TB, C_pad), lambda i: (i, 0)))
    out_shape = (jax.ShapeDtypeStruct((B_pad, C_pad), jnp.float32),
                 jax.ShapeDtypeStruct((B_pad, C_pad), jnp.float32))

    # Advisory cost hint for XLA's scheduler around the custom call.
    dims = [input_dim, 128, 64, 32, 16, C_pad]
    flops = 2 * B_pad * sum(dims[i] * dims[i + 1] for i in range(5))
    weight_bytes = sum(int(w.size) * w.dtype.itemsize for w in weight_inputs)
    in_bytes = B_pad * input_dim * x.dtype.itemsize
    cost = pl.CostEstimate(
        flops=flops,
        transcendentals=B_pad * C_pad,
        bytes_accessed=in_bytes + 4 * B_pad * 2 * C_pad + weight_bytes,
    )

    kernel = functools.partial(_bike_kernel, float(1.0 / temperature),
                               compute_dtype)

    logits, probs = pl.pallas_call(
        kernel,
        grid=grid,
        in_specs=[x_spec] + weight_specs,
        out_specs=out_specs,
        out_shape=out_shape,
        compiler_params=pltpu.CompilerParams(
            dimension_semantics=("parallel",),   # shard batch tiles across TCs
            vmem_limit_bytes=32 << 20,           # explicit (v5e default is 16M)
        ),
        cost_estimate=cost,
    )(x, *weight_inputs)

    # Slice off batch padding rows and padded (sentinel) class lanes.
    return logits[:B, :num_classes], probs[:B, :num_classes]


def init_params(key, input_dim, num_classes):
    dims = [input_dim, 128, 64, 32, 16, num_classes]
    params = {}
    keys = jax.random.split(key, 10)
    ki = 0
    for i in range(1, 6):
        fan_in, fan_out = dims[i - 1], dims[i]
        bound = 1.0 / jnp.sqrt(jnp.float32(fan_in))
        params[f"w{i}"] = jax.random.uniform(
            keys[ki], (fan_in, fan_out), jnp.float32, -bound, bound)
        ki += 1
        params[f"b{i}"] = jax.random.uniform(
            keys[ki], (fan_out,), jnp.float32, -bound, bound)
        ki += 1
    # BatchNorm1d eval-mode params (use non-trivial values to exercise fold).
    for i, d in zip((1, 2, 3, 4), dims[1:5]):
        kg, kb, km, kv = jax.random.split(jax.random.fold_in(key, i), 4)
        params[f"bn{i}_gamma"] = 1.0 + 0.1 * jax.random.normal(kg, (d,), jnp.float32)
        params[f"bn{i}_beta"] = 0.1 * jax.random.normal(kb, (d,), jnp.float32)
        params[f"bn{i}_mean"] = 0.1 * jax.random.normal(km, (d,), jnp.float32)
        params[f"bn{i}_var"] = jnp.abs(1.0 + 0.1 * jax.random.normal(kv, (d,), jnp.float32))
    return params


def reference_forward(x, params, temperature=1.0):
    eps = 1e-5
    h = x
    for i in (1, 2, 3, 4):
        h = h @ params[f"w{i}"] + params[f"b{i}"]
        scale = params[f"bn{i}_gamma"] / jnp.sqrt(params[f"bn{i}_var"] + eps)
        shift = params[f"bn{i}_beta"] - params[f"bn{i}_mean"] * scale
        h = jnp.maximum(h * scale + shift, 0.0)
    logits = h @ params["w5"] + params["b5"]
    probs = jax.nn.softmax(logits / temperature, axis=1)
    return logits, probs


if __name__ == "__main__":
    key = jax.random.PRNGKey(0)
    kx, kp, kx2, kx3 = jax.random.split(key, 4)

    input_dim, num_classes = 32, 10
    params = init_params(kp, input_dim, num_classes)

    # Case 1: batch multiple of 8, f32 path, temperature 1.0.
    x = jax.random.normal(kx, (8, input_dim), jnp.float32)
    logits, probs = jax.block_until_ready(
        bike_model_forward(x, params, temperature=1.0))
    ref_logits, ref_probs = reference_forward(x, params, temperature=1.0)
    assert logits.shape == (8, num_classes) and probs.shape == (8, num_classes)
    assert jnp.allclose(logits, ref_logits, atol=1e-4, rtol=1e-4)
    assert jnp.allclose(probs, ref_probs, atol=1e-5, rtol=1e-4)
    assert jnp.allclose(jnp.sum(probs, axis=1), 1.0, atol=1e-5)

    # Case 2: ragged batch (padding + multi-tile grid) + temperature != 1.
    x2 = jax.random.normal(kx2, (13, input_dim), jnp.float32)
    logits2, probs2 = jax.block_until_ready(
        bike_model_forward(x2, params, temperature=2.5))
    ref_logits2, ref_probs2 = reference_forward(x2, params, temperature=2.5)
    assert logits2.shape == (13, num_classes) and probs2.shape == (13, num_classes)
    assert jnp.allclose(logits2, ref_logits2, atol=1e-4, rtol=1e-4)
    assert jnp.allclose(probs2, ref_probs2, atol=1e-5, rtol=1e-4)
    assert jnp.allclose(jnp.sum(probs2, axis=1), 1.0, atol=1e-5)

    # Case 3: bf16 MXU path (f32 accumulation, f32 fc5+softmax epilogue).
    x3 = jax.random.normal(kx3, (64, input_dim), jnp.float32)
    logits3, probs3 = jax.block_until_ready(
        bike_model_forward(x3, params, temperature=1.0, use_bf16=True))
    ref_logits3, ref_probs3 = reference_forward(x3, params, temperature=1.0)
    assert logits3.shape == (64, num_classes)
    assert jnp.allclose(logits3, ref_logits3, atol=1e-1, rtol=5e-2)
    assert jnp.allclose(probs3, ref_probs3, atol=2e-2, rtol=5e-2)
    assert jnp.allclose(jnp.sum(probs3, axis=1), 1.0, atol=1e-5)

    print("KERNEL_OK")
</pallas_src>

<mosaic_0001>
module attributes {stable_mosaic.version = 11 : i64} {
  func.func @_bike_kernel(%arg0: i32, %arg1: memref<8x32xf32, #tpu.memory_space<vmem>>, %arg2: memref<32x128xf32, #tpu.memory_space<vmem>>, %arg3: memref<1x128xf32, #tpu.memory_space<vmem>>, %arg4: memref<128x64xf32, #tpu.memory_space<vmem>>, %arg5: memref<1x64xf32, #tpu.memory_space<vmem>>, %arg6: memref<64x32xf32, #tpu.memory_space<vmem>>, %arg7: memref<1x32xf32, #tpu.memory_space<vmem>>, %arg8: memref<32x16xf32, #tpu.memory_space<vmem>>, %arg9: memref<1x16xf32, #tpu.memory_space<vmem>>, %arg10: memref<16x128xf32, #tpu.memory_space<vmem>>, %arg11: memref<1x128xf32, #tpu.memory_space<vmem>>, %arg12: memref<8x128xf32, #tpu.memory_space<vmem>>, %arg13: memref<8x128xf32, #tpu.memory_space<vmem>>) attributes {dimension_semantics = [#tpu.dimension_semantics<parallel>], iteration_bounds = array<i64: 1>, scalar_prefetch = 0 : i64, scratch_operands = 0 : i64, tpu.core_type = #tpu.core_type<tc>, window_params = [{transform_indices = @transform_0, window_bounds = array<i64: 8, 32>}, {pipeline_mode = #tpu.pipeline_mode<synchronous>, transform_indices = @transform_1, window_bounds = array<i64: 32, 128>}, {pipeline_mode = #tpu.pipeline_mode<synchronous>, transform_indices = @transform_2, window_bounds = array<i64: 1, 128>}, {pipeline_mode = #tpu.pipeline_mode<synchronous>, transform_indices = @transform_3, window_bounds = array<i64: 128, 64>}, {pipeline_mode = #tpu.pipeline_mode<synchronous>, transform_indices = @transform_4, window_bounds = array<i64: 1, 64>}, {pipeline_mode = #tpu.pipeline_mode<synchronous>, transform_indices = @transform_5, window_bounds = array<i64: 64, 32>}, {pipeline_mode = #tpu.pipeline_mode<synchronous>, transform_indices = @transform_6, window_bounds = array<i64: 1, 32>}, {pipeline_mode = #tpu.pipeline_mode<synchronous>, transform_indices = @transform_7, window_bounds = array<i64: 32, 16>}, {pipeline_mode = #tpu.pipeline_mode<synchronous>, transform_indices = @transform_8, window_bounds = array<i64: 1, 16>}, {pipeline_mode = #tpu.pipeline_mode<synchronous>, transform_indices = @transform_9, window_bounds = array<i64: 16, 128>}, {pipeline_mode = #tpu.pipeline_mode<synchronous>, transform_indices = @transform_10, window_bounds = array<i64: 1, 128>}, {transform_indices = @transform_11, window_bounds = array<i64: 8, 128>}, {transform_indices = @transform_12, window_bounds = array<i64: 8, 128>}]} {
    %c0 = arith.constant 0 : index
    %c0_0 = arith.constant 0 : index
    %0 = vector.load %arg1[%c0, %c0_0] : memref<8x32xf32, #tpu.memory_space<vmem>>, vector<8x32xf32>
    %c0_1 = arith.constant 0 : index
    %c0_2 = arith.constant 0 : index
    %1 = vector.load %arg2[%c0_1, %c0_2] : memref<32x128xf32, #tpu.memory_space<vmem>>, vector<32x128xf32>
    %cst = arith.constant dense<0.000000e+00> : vector<8x128xf32>
    %2 = tpu.matmul %0, %1, %cst {dimension_numbers = #tpu.dot_dimension_numbers<[1], [0], [0], [1], [0, 0, 1, 1], [], []>} : vector<8x32xf32>, vector<32x128xf32>, vector<8x128xf32> -> vector<8x128xf32>
    %c0_3 = arith.constant 0 : index
    %c0_4 = arith.constant 0 : index
    %3 = vector.load %arg3[%c0_3, %c0_4] : memref<1x128xf32, #tpu.memory_space<vmem>>, vector<1x128xf32>
    %4 = vector.broadcast %3 : vector<1x128xf32> to vector<8x128xf32>
    %5 = arith.addf %2, %4 : vector<8x128xf32>
    %cst_5 = arith.constant 0.000000e+00 : f32
    %6 = vector.broadcast %cst_5 : f32 to vector<8x128xf32>
    %7 = arith.maximumf %5, %6 : vector<8x128xf32>
    %c0_6 = arith.constant 0 : index
    %c0_7 = arith.constant 0 : index
    %8 = vector.load %arg4[%c0_6, %c0_7] : memref<128x64xf32, #tpu.memory_space<vmem>>, vector<128x64xf32>
    %cst_8 = arith.constant dense<0.000000e+00> : vector<8x64xf32>
    %9 = tpu.matmul %7, %8, %cst_8 {dimension_numbers = #tpu.dot_dimension_numbers<[1], [0], [0], [1], [0, 0, 1, 1], [], []>} : vector<8x128xf32>, vector<128x64xf32>, vector<8x64xf32> -> vector<8x64xf32>
    %c0_9 = arith.constant 0 : index
    %c0_10 = arith.constant 0 : index
    %10 = vector.load %arg5[%c0_9, %c0_10] : memref<1x64xf32, #tpu.memory_space<vmem>>, vector<1x64xf32>
    %11 = vector.broadcast %10 : vector<1x64xf32> to vector<8x64xf32>
    %12 = arith.addf %9, %11 : vector<8x64xf32>
    %cst_11 = arith.constant 0.000000e+00 : f32
    %13 = vector.broadcast %cst_11 : f32 to vector<8x64xf32>
    %14 = arith.maximumf %12, %13 : vector<8x64xf32>
    %c0_12 = arith.constant 0 : index
    %c0_13 = arith.constant 0 : index
    %15 = vector.load %arg6[%c0_12, %c0_13] : memref<64x32xf32, #tpu.memory_space<vmem>>, vector<64x32xf32>
    %cst_14 = arith.constant dense<0.000000e+00> : vector<8x32xf32>
    %16 = tpu.matmul %14, %15, %cst_14 {dimension_numbers = #tpu.dot_dimension_numbers<[1], [0], [0], [1], [0, 0, 1, 1], [], []>} : vector<8x64xf32>, vector<64x32xf32>, vector<8x32xf32> -> vector<8x32xf32>
    %c0_15 = arith.constant 0 : index
    %c0_16 = arith.constant 0 : index
    %17 = vector.load %arg7[%c0_15, %c0_16] : memref<1x32xf32, #tpu.memory_space<vmem>>, vector<1x32xf32>
    %18 = vector.broadcast %17 : vector<1x32xf32> to vector<8x32xf32>
    %19 = arith.addf %16, %18 : vector<8x32xf32>
    %cst_17 = arith.constant 0.000000e+00 : f32
    %20 = vector.broadcast %cst_17 : f32 to vector<8x32xf32>
    %21 = arith.maximumf %19, %20 : vector<8x32xf32>
    %c0_18 = arith.constant 0 : index
    %c0_19 = arith.constant 0 : index
    %22 = vector.load %arg8[%c0_18, %c0_19] : memref<32x16xf32, #tpu.memory_space<vmem>>, vector<32x16xf32>
    %cst_20 = arith.constant dense<0.000000e+00> : vector<8x16xf32>
    %23 = tpu.matmul %21, %22, %cst_20 {dimension_numbers = #tpu.dot_dimension_numbers<[1], [0], [0], [1], [0, 0, 1, 1], [], []>} : vector<8x32xf32>, vector<32x16xf32>, vector<8x16xf32> -> vector<8x16xf32>
    %c0_21 = arith.constant 0 : index
    %c0_22 = arith.constant 0 : index
    %24 = vector.load %arg9[%c0_21, %c0_22] : memref<1x16xf32, #tpu.memory_space<vmem>>, vector<1x16xf32>
    %25 = vector.broadcast %24 : vector<1x16xf32> to vector<8x16xf32>
    %26 = arith.addf %23, %25 : vector<8x16xf32>
    %cst_23 = arith.constant 0.000000e+00 : f32
    %27 = vector.broadcast %cst_23 : f32 to vector<8x16xf32>
    %28 = arith.maximumf %26, %27 : vector<8x16xf32>
    %c0_24 = arith.constant 0 : index
    %c0_25 = arith.constant 0 : index
    %29 = vector.load %arg10[%c0_24, %c0_25] : memref<16x128xf32, #tpu.memory_space<vmem>>, vector<16x128xf32>
    %cst_26 = arith.constant dense<0.000000e+00> : vector<8x128xf32>
    %30 = tpu.matmul %28, %29, %cst_26 {dimension_numbers = #tpu.dot_dimension_numbers<[1], [0], [0], [1], [0, 0, 1, 1], [], []>} : vector<8x16xf32>, vector<16x128xf32>, vector<8x128xf32> -> vector<8x128xf32>
    %c0_27 = arith.constant 0 : index
    %c0_28 = arith.constant 0 : index
    %31 = vector.load %arg11[%c0_27, %c0_28] : memref<1x128xf32, #tpu.memory_space<vmem>>, vector<1x128xf32>
    %32 = vector.broadcast %31 : vector<1x128xf32> to vector<8x128xf32>
    %33 = arith.addf %30, %32 : vector<8x128xf32>
    %c0_29 = arith.constant 0 : index
    %c0_30 = arith.constant 0 : index
    %34 = vector.load %arg12[%c0_29, %c0_30] : memref<8x128xf32, #tpu.memory_space<vmem>>, vector<8x128xf32>
    tpu.vector_store %arg12[%c0_29, %c0_30], %33 {strides = array<i32>} : memref<8x128xf32, #tpu.memory_space<vmem>>, vector<8x128xf32>,
    %cst_31 = arith.constant 1.000000e+00 : f32
    %35 = vector.broadcast %cst_31 : f32 to vector<8x128xf32>
    %36 = arith.mulf %33, %35 : vector<8x128xf32>
    %cst_32 = arith.constant dense<0xFF800000> : vector<8xf32>
    %37 = vector.multi_reduction <maximumf>, %36, %cst_32 [1] : vector<8x128xf32> to vector<8xf32>
    %38 = vector.shape_cast %37 : vector<8xf32> to vector<8x1xf32>
    %39 = vector.broadcast %38 : vector<8x1xf32> to vector<8x128xf32>
    %40 = arith.subf %36, %39 : vector<8x128xf32>
    %41 = math.exp %40 : vector<8x128xf32>
    %cst_33 = arith.constant dense<0.000000e+00> : vector<8xf32>
    %42 = vector.multi_reduction <add>, %41, %cst_33 [1] : vector<8x128xf32> to vector<8xf32>
    %43 = vector.shape_cast %42 : vector<8xf32> to vector<8x1xf32>
    %44 = tpu.reciprocal %43 : vector<8x1xf32> -> vector<8x1xf32>
    %45 = vector.broadcast %44 : vector<8x1xf32> to vector<8x128xf32>
    %46 = arith.mulf %41, %45 : vector<8x128xf32>
    %c0_34 = arith.constant 0 : index
    %c0_35 = arith.constant 0 : index
    %47 = vector.load %arg13[%c0_34, %c0_35] : memref<8x128xf32, #tpu.memory_space<vmem>>, vector<8x128xf32>
    tpu.vector_store %arg13[%c0_34, %c0_35], %46 {strides = array<i32>} : memref<8x128xf32, #tpu.memory_space<vmem>>, vector<8x128xf32>,
    return
  }
  func.func @transform_0(%arg0: i32) -> (i32, i32) {
    %c0_i32 = arith.constant 0 : i32
    %c0_i32_0 = arith.constant 0 : i32
    return %arg0, %c0_i32 : i32, i32
  }
  func.func @transform_1(%arg0: i32) -> (i32, i32) {
    %c0_i32 = arith.constant 0 : i32
    %c0_i32_0 = arith.constant 0 : i32
    %c0_i32_1 = arith.constant 0 : i32
    return %c0_i32, %c0_i32_0 : i32, i32
  }
  func.func @transform_2(%arg0: i32) -> (i32, i32) {
    %c0_i32 = arith.constant 0 : i32
    %c0_i32_0 = arith.constant 0 : i32
    %c0_i32_1 = arith.constant 0 : i32
    return %c0_i32, %c0_i32_0 : i32, i32
  }
  func.func @transform_3(%arg0: i32) -> (i32, i32) {
    %c0_i32 = arith.constant 0 : i32
    %c0_i32_0 = arith.constant 0 : i32
    %c0_i32_1 = arith.constant 0 : i32
    return %c0_i32, %c0_i32_0 : i32, i32
  }
  func.func @transform_4(%arg0: i32) -> (i32, i32) {
    %c0_i32 = arith.constant 0 : i32
    %c0_i32_0 = arith.constant 0 : i32
    %c0_i32_1 = arith.constant 0 : i32
    return %c0_i32, %c0_i32_0 : i32, i32
  }
  func.func @transform_5(%arg0: i32) -> (i32, i32) {
    %c0_i32 = arith.constant 0 : i32
    %c0_i32_0 = arith.constant 0 : i32
    %c0_i32_1 = arith.constant 0 : i32
    return %c0_i32, %c0_i32_0 : i32, i32
  }
  func.func @transform_6(%arg0: i32) -> (i32, i32) {
    %c0_i32 = arith.constant 0 : i32
    %c0_i32_0 = arith.constant 0 : i32
    %c0_i32_1 = arith.constant 0 : i32
    return %c0_i32, %c0_i32_0 : i32, i32
  }
  func.func @transform_7(%arg0: i32) -> (i32, i32) {
    %c0_i32 = arith.constant 0 : i32
    %c0_i32_0 = arith.constant 0 : i32
    %c0_i32_1 = arith.constant 0 : i32
    return %c0_i32, %c0_i32_0 : i32, i32
  }
  func.func @transform_8(%arg0: i32) -> (i32, i32) {
    %c0_i32 = arith.constant 0 : i32
    %c0_i32_0 = arith.constant 0 : i32
    %c0_i32_1 = arith.constant 0 : i32
    return %c0_i32, %c0_i32_0 : i32, i32
  }
  func.func @transform_9(%arg0: i32) -> (i32, i32) {
    %c0_i32 = arith.constant 0 : i32
    %c0_i32_0 = arith.constant 0 : i32
    %c0_i32_1 = arith.constant 0 : i32
    return %c0_i32, %c0_i32_0 : i32, i32
  }
  func.func @transform_10(%arg0: i32) -> (i32, i32) {
    %c0_i32 = arith.constant 0 : i32
    %c0_i32_0 = arith.constant 0 : i32
    %c0_i32_1 = arith.constant 0 : i32
    return %c0_i32, %c0_i32_0 : i32, i32
  }
  func.func @transform_11(%arg0: i32) -> (i32, i32) {
    %c0_i32 = arith.constant 0 : i32
    %c0_i32_0 = arith.constant 0 : i32
    return %arg0, %c0_i32 : i32, i32
  }
  func.func @transform_12(%arg0: i32) -> (i32, i32) {
    %c0_i32 = arith.constant 0 : i32
    %c0_i32_0 = arith.constant 0 : i32
    return %arg0, %c0_i32 : i32, i32
  }
}

</mosaic_0001>

<llo_original>
// kernel: tpu_custom_call.1
$region0: #{tpu_custom_call.1}
  #allocation0 [shape = 'u32[]', space=smem, size = 0x4, offset = 0x4, fixed_abs, tag = 'smem constant byte address 0x4 - core index']
  #allocation1 [shape = 'u32[144,128]{1,0:T(1,128)}', space=vmem, size = 0x12000, scoped, tag = 'internal scratch']
  %s0 = inlined_call_operand.vmem [shape: f32[8,32], index: 0, kind: input, shape index: {}]
  %s1 = inlined_call_operand.vmem [shape: f32[32,128], index: 1, kind: input, shape index: {}]
  %s2 = inlined_call_operand.vmem [shape: f32[1,128], index: 2, kind: input, shape index: {}]
  %s3 = inlined_call_operand.vmem [shape: f32[128,64], index: 3, kind: input, shape index: {}]
  %s4 = inlined_call_operand.vmem [shape: f32[1,64], index: 4, kind: input, shape index: {}]
  %s5 = inlined_call_operand.vmem [shape: f32[64,32], index: 5, kind: input, shape index: {}]
  %s6 = inlined_call_operand.vmem [shape: f32[1,32], index: 6, kind: input, shape index: {}]
  %s7 = inlined_call_operand.vmem [shape: f32[32,16], index: 7, kind: input, shape index: {}]
  %s8 = inlined_call_operand.vmem [shape: f32[1,16], index: 8, kind: input, shape index: {}]
  %s9 = inlined_call_operand.vmem [shape: f32[16,128], index: 9, kind: input, shape index: {}]
  %s10 = inlined_call_operand.vmem [shape: f32[1,128], index: 10, kind: input, shape index: {}]
  %s11 = inlined_call_operand.hbm [shape: f32[8,128], index: 11, kind: output, shape index: {0}]
  %s12 = inlined_call_operand.hbm [shape: f32[8,128], index: 12, kind: output, shape index: {1}]
  %13 = xla_tuple %s11, %s12
  %s14 = sld [smem:[#allocation0]]
  $region62: #{tpu_custom_call.1} parent=0
    _
  %s16 = ssub.s32 1, %s14
  %s17 = scalar_select 0, %s16, %s14
  $region1: #{tpu_custom_call.1} parent=0
    #allocation2 [shape = 'u8[4096]{0}', space=vmem, size = 0x1000, scoped, tag = 'output window, operand 0, single buffered']
    #allocation3 [shape = 's32[1]{0}', space=sflag, size = 0x4, scoped, tag = 'scoped memory for tpu_custom_call.1']
    #allocation4 [shape = 'u8[4096]{0}', space=vmem, size = 0x1000, scoped, tag = 'output window, operand 1, single buffered']
    #allocation5 [shape = 's32[1]{0}', space=sflag, size = 0x4, scoped, tag = 'scoped memory for tpu_custom_call.1']
    %18 = vsyncpa [#allocation3], 0
    %19 = vsyncpa [#allocation5], 0
    // Predicated region
    $region2: #{tpu_custom_call.1} parent=1 // pred_check
      _
    $region3: #{tpu_custom_call.1} parent=1 // pred_check_branch
      %21 = sbr.rel (0) target = $region5
    $region4: #{tpu_custom_call.1} parent=1 // pred_region
      _
    $region5: #{tpu_custom_call.1} parent=1 // pred_fallthru
      _
    // Predicated region
    $region6: #{tpu_custom_call.1} parent=1 // pred_check
      _
    $region7: #{tpu_custom_call.1} parent=1 // pred_check_branch
      %23 = sbr.rel (0) target = $region9
    $region8: #{tpu_custom_call.1} parent=1 // pred_region
      _
    $region9: #{tpu_custom_call.1} parent=1 // pred_fallthru
      _
    // Predicated region
    $region10: #{tpu_custom_call.1} parent=1 // pred_check
      _
    $region11: #{tpu_custom_call.1} parent=1 // pred_check_branch
      %25 = sbr.rel (0) target = $region13
    $region12: #{tpu_custom_call.1} parent=1 // pred_region
      _
    $region13: #{tpu_custom_call.1} parent=1 // pred_fallthru
      _
    // Predicated region
    $region14: #{tpu_custom_call.1} parent=1 // pred_check
      _
    $region15: #{tpu_custom_call.1} parent=1 // pred_check_branch
      %27 = sbr.rel (0) target = $region17
    $region16: #{tpu_custom_call.1} parent=1 // pred_region
      _
    $region17: #{tpu_custom_call.1} parent=1 // pred_fallthru
      _
    // Predicated region
    $region18: #{tpu_custom_call.1} parent=1 // pred_check
      _
    $region19: #{tpu_custom_call.1} parent=1 // pred_check_branch
      %29 = sbr.rel (0) target = $region21
    $region20: #{tpu_custom_call.1} parent=1 // pred_region
      _
    $region21: #{tpu_custom_call.1} parent=1 // pred_fallthru
      _
    // Predicated region
    $region22: #{tpu_custom_call.1} parent=1 // pred_check
      _
    $region23: #{tpu_custom_call.1} parent=1 // pred_check_branch
      %31 = sbr.rel (0) target = $region25
    $region24: #{tpu_custom_call.1} parent=1 // pred_region
      _
    $region25: #{tpu_custom_call.1} parent=1 // pred_fallthru
      _
    // Predicated region
    $region26: #{tpu_custom_call.1} parent=1 // pred_check
      _
    $region27: #{tpu_custom_call.1} parent=1 // pred_check_branch
      %33 = sbr.rel (0) target = $region29
    $region28: #{tpu_custom_call.1} parent=1 // pred_region
      _
    $region29: #{tpu_custom_call.1} parent=1 // pred_fallthru
      _
    // Predicated region
    $region30: #{tpu_custom_call.1} parent=1 // pred_check
      _
    $region31: #{tpu_custom_call.1} parent=1 // pred_check_branch
      %35 = sbr.rel (0) target = $region33
    $region32: #{tpu_custom_call.1} parent=1 // pred_region
      _
    $region33: #{tpu_custom_call.1} parent=1 // pred_fallthru
      _
    // Predicated region
    $region34: #{tpu_custom_call.1} parent=1 // pred_check
      _
    $region35: #{tpu_custom_call.1} parent=1 // pred_check_branch
      %37 = sbr.rel (0) target = $region37
    $region36: #{tpu_custom_call.1} parent=1 // pred_region
      _
    $region37: #{tpu_custom_call.1} parent=1 // pred_fallthru
      _
    // Predicated region
    $region38: #{tpu_custom_call.1} parent=1 // pred_check
      _
    $region39: #{tpu_custom_call.1} parent=1 // pred_check_branch
      %39 = sbr.rel (0) target = $region41
    $region40: #{tpu_custom_call.1} parent=1 // pred_region
      _
    $region41: #{tpu_custom_call.1} parent=1 // pred_fallthru
      _
    // Predicated region
    $region42: #{tpu_custom_call.1} parent=1 // pred_check
      _
    $region43: #{tpu_custom_call.1} parent=1 // pred_check_branch
      %41 = sbr.rel (0) target = $region45
    $region44: #{tpu_custom_call.1} parent=1 // pred_region
      _
    $region45: #{tpu_custom_call.1} parent=1 // pred_fallthru
      _
    %v42 = vld [vmem:[%s0] sm:$0xff]
    %v43 = vld [vmem:[%s1] sm:$0xff]
    %v44 = vld [vmem:[%s1 + $0x8] sm:$0xff]
    %v45 = vld [vmem:[%s1 + $0x10] sm:$0xff]
    %v46 = vld [vmem:[%s1 + $0x18] sm:$0xff]
    %v47 = vld [vmem:[%s2] sm:$0x1]
    %v49 = vlaneseq
    %v50 = vshrl.u32 %v49, 7
    %v51 = vsub.s32 0, %v50
    %v52 = vrot.slane %v47, %v51
    %vm54 = vcmask 261120
    %v56 = vsel %vm54, %v42, 0
    %58 = vmatprep.subr.mxu0 0.0
    %59 = vmatpush1.msra.mxu0 %v43
    %60 = vmatprep.subr.mxu0 0.0
    %61 = vmatpush1.msra.mxu0 %v44
    %62 = vmatprep.subr.mxu0 0.0
    %63 = vmatpush1.msra.mxu0 %v45
    %64 = vmatprep.subr.mxu0 0.0
    %65 = vmatpush1.msra.mxu0 %v46
    %66 = vmatprep.subr.mxu0 0.0
    %67 = vmatpush1.msra.mxu0 0.0
    %68 = vmatprep.subr.mxu0 0.0
    %69 = vmatpush1.msra.mxu0 0.0
    %70 = vmatprep.subr.mxu0 0.0
    %71 = vmatpush1.msra.mxu0 0.0
    %72 = vmatprep.subr.mxu0 0.0
    %73 = vmatpush1.msra.mxu0 0.0
    %74 = vmatprep.subr.mxu0 0.0
    %75 = vmatpush1.msra.mxu0 0.0
    %76 = vmatprep.subr.mxu0 0.0
    %77 = vmatpush1.msra.mxu0 0.0
    %78 = vmatprep.subr.mxu0 0.0
    %79 = vmatpush1.msra.mxu0 0.0
    %80 = vmatprep.subr.mxu0 0.0
    %81 = vmatpush1.msra.mxu0 0.0
    %82 = vmatprep.subr.mxu0 0.0
    %83 = vmatpush1.msra.mxu0 0.0
    %84 = vmatprep.subr.mxu0 0.0
    %85 = vmatpush1.msra.mxu0 0.0
    %86 = vmatprep.subr.mxu0 0.0
    %87 = vmatpush1.msra.mxu0 0.0
    %88 = vmatprep.subr.mxu0 0.0
    %89 = vmatpush1.msra.mxu0 0.0
    %90 = vmatprep.subr.mxu0 0.0
    %91 = vmatpush1.msra.mxu0 0.0
    %92 = vmatprep.subr.mxu0 0.0
    %93 = vmatpush1.msra.mxu0 0.0
    %94 = vmatprep.subr.mxu0 0.0
    %95 = vmatpush1.msra.mxu0 0.0
    %96 = vmatprep.subr.mxu0 0.0
    %97 = vmatpush1.msra.mxu0 0.0
    %98 = vmatprep.subr.mxu0 0.0
    %99 = vmatpush1.msra.mxu0 0.0
    %100 = vmatprep.subr.mxu0 0.0
    %101 = vmatpush1.msra.mxu0 0.0
    %102 = vmatprep.subr.mxu0 0.0
    %103 = vmatpush1.msra.mxu0 0.0
    %104 = vmatprep.subr.mxu0 0.0
    %105 = vmatpush1.msra.mxu0 0.0
    %106 = vmatprep.subr.mxu0 0.0
    %107 = vmatpush1.msra.mxu0 0.0
    %108 = vmatprep.subr.mxu0 0.0
    %109 = vmatpush1.msra.mxu0 0.0
    %110 = vmatprep.subr.mxu0 0.0
    %111 = vmatpush1.msra.mxu0 0.0
    %112 = vmatprep.subr.mxu0 0.0
    %113 = vmatpush1.msra.mxu0 0.0
    %114 = vmatprep.subr.mxu0 0.0
    %115 = vmatpush1.msra.mxu0 0.0
    %116 = vmatprep.subr.mxu0 0.0
    %117 = vmatpush1.msra.mxu0 0.0
    %118 = vmatprep.subr.mxu0 0.0
    %119 = vmatpush1.msra.mxu0 0.0
    %120 = vmatprep.subr.mxu0 0.0
    %121 = vmatpush1.msra.mxu0 0.0
    %122 = vmatprep.mubr.f32.mxu0 0.0
    %123 = vmatmul.mubr.f32.gmra.mrb[0].mxu0 %v56
    %v124 = vpop.f32.mrb[0].mxu0
    %v125 = vadd.f32 %v52, %v124
    %v126 = vpop.f32.mrb[0].mxu0
    %127 = vdwg.mxu0
    %v128 = vmax.f32 %v125, 0.0
    %v129 = vld [vmem:[%s3] sm:$0xff]
    %v130 = vld [vmem:[%s3 + $0x8] sm:$0xff]
    %v131 = vld [vmem:[%s3 + $0x10] sm:$0xff]
    %v132 = vld [vmem:[%s3 + $0x18] sm:$0xff]
    %v133 = vld [vmem:[%s3 + $0x20] sm:$0xff]
    %v134 = vld [vmem:[%s3 + $0x28] sm:$0xff]
    %v135 = vld [vmem:[%s3 + $0x30] sm:$0xff]
    %v136 = vld [vmem:[%s3 + $0x38] sm:$0xff]
    %v137 = vld [vmem:[%s3 + $0x40] sm:$0xff]
    %v138 = vld [vmem:[%s3 + $0x48] sm:$0xff]
    %v139 = vld [vmem:[%s3 + $0x50] sm:$0xff]
    %v140 = vld [vmem:[%s3 + $0x58] sm:$0xff]
    %v141 = vld [vmem:[%s3 + $0x60] sm:$0xff]
    %v142 = vld [vmem:[%s3 + $0x68] sm:$0xff]
    %v143 = vld [vmem:[%s3 + $0x70] sm:$0xff]
    %v144 = vld [vmem:[%s3 + $0x78] sm:$0xff]
    %v145 = vld [vmem:[%s4] sm:$0x1]
    %v147 = vlaneseq
    %v148 = vshrl.u32 %v147, 7
    %v149 = vsub.s32 0, %v148
    %v150 = vrot.slane %v145, %v149
    %152 = vmatprep.subr.mxu0 0.0
    %153 = vmatpush1.msra.mxu0 %v129
    %154 = vmatprep.subr.mxu0 0.0
    %155 = vmatpush1.msra.mxu0 %v130
    %156 = vmatprep.subr.mxu0 0.0
    %157 = vmatpush1.msra.mxu0 %v131
    %158 = vmatprep.subr.mxu0 0.0
    %159 = vmatpush1.msra.mxu0 %v132
    %160 = vmatprep.subr.mxu0 0.0
    %161 = vmatpush1.msra.mxu0 %v133
    %162 = vmatprep.subr.mxu0 0.0
    %163 = vmatpush1.msra.mxu0 %v134
    %164 = vmatprep.subr.mxu0 0.0
    %165 = vmatpush1.msra.mxu0 %v135
    %166 = vmatprep.subr.mxu0 0.0
    %167 = vmatpush1.msra.mxu0 %v136
    %168 = vmatprep.subr.mxu0 0.0
    %169 = vmatpush1.msra.mxu0 %v137
    %170 = vmatprep.subr.mxu0 0.0
    %171 = vmatpush1.msra.mxu0 %v138
    %172 = vmatprep.subr.mxu0 0.0
    %173 = vmatpush1.msra.mxu0 %v139
    %174 = vmatprep.subr.mxu0 0.0
    %175 = vmatpush1.msra.mxu0 %v140
    %176 = vmatprep.subr.mxu0 0.0
    %177 = vmatpush1.msra.mxu0 %v141
    %178 = vmatprep.subr.mxu0 0.0
    %179 = vmatpush1.msra.mxu0 %v142
    %180 = vmatprep.subr.mxu0 0.0
    %181 = vmatpush1.msra.mxu0 %v143
    %182 = vmatprep.subr.mxu0 0.0
    %183 = vmatpush1.msra.mxu0 %v144
    %184 = vmatprep.subr.mxu0 0.0
    %185 = vmatpush1.msra.mxu0 0.0
    %186 = vmatprep.subr.mxu0 0.0
    %187 = vmatpush1.msra.mxu0 0.0
    %188 = vmatprep.subr.mxu0 0.0
    %189 = vmatpush1.msra.mxu0 0.0
    %190 = vmatprep.subr.mxu0 0.0
    %191 = vmatpush1.msra.mxu0 0.0
    %192 = vmatprep.subr.mxu0 0.0
    %193 = vmatpush1.msra.mxu0 0.0
    %194 = vmatprep.subr.mxu0 0.0
    %195 = vmatpush1.msra.mxu0 0.0
    %196 = vmatprep.subr.mxu0 0.0
    %197 = vmatpush1.msra.mxu0 0.0
    %198 = vmatprep.subr.mxu0 0.0
    %199 = vmatpush1.msra.mxu0 0.0
    %200 = vmatprep.subr.mxu0 0.0
    %201 = vmatpush1.msra.mxu0 0.0
    %202 = vmatprep.subr.mxu0 0.0
    %203 = vmatpush1.msra.mxu0 0.0
    %204 = vmatprep.subr.mxu0 0.0
    %205 = vmatpush1.msra.mxu0 0.0
    %206 = vmatprep.subr.mxu0 0.0
    %207 = vmatpush1.msra.mxu0 0.0
    %208 = vmatprep.subr.mxu0 0.0
    %209 = vmatpush1.msra.mxu0 0.0
    %210 = vmatprep.subr.mxu0 0.0
    %211 = vmatpush1.msra.mxu0 0.0
    %212 = vmatprep.subr.mxu0 0.0
    %213 = vmatpush1.msra.mxu0 0.0
    %214 = vmatprep.subr.mxu0 0.0
    %215 = vmatpush1.msra.mxu0 0.0
    %216 = vmatprep.mubr.f32.mxu0 0.0
    %217 = vmatmul.mubr.f32.gmra.mrb[0].mxu0 %v128
    %v218 = vpop.f32.mrb[0].mxu0
    %v219 = vadd.f32 %v150, %v218
    %v220 = vpop.f32.mrb[0].mxu0
    %221 = vdwg.mxu0
    %v222 = vmax.f32 %v219, 0.0
    %v223 = vld [vmem:[%s5] sm:$0xff]
    %v224 = vld [vmem:[%s5 + $0x8] sm:$0xff]
    %v225 = vld [vmem:[%s5 + $0x10] sm:$0xff]
    %v226 = vld [vmem:[%s5 + $0x18] sm:$0xff]
    %v227 = vld [vmem:[%s5 + $0x20] sm:$0xff]
    %v228 = vld [vmem:[%s5 + $0x28] sm:$0xff]
    %v229 = vld [vmem:[%s5 + $0x30] sm:$0xff]
    %v230 = vld [vmem:[%s5 + $0x38] sm:$0xff]
    %v231 = vld [vmem:[%s6] sm:$0x1]
    %v233 = vlaneseq
    %v234 = vshrl.u32 %v233, 7
    %v235 = vsub.s32 0, %v234
    %v236 = vrot.slane %v231, %v235
    %vm238 = vcmask 523264
    %v240 = vsel %vm238, %v222, 0
    %242 = vmatprep.subr.mxu0 0.0
    %243 = vmatpush1.msra.mxu0 %v223
    %244 = vmatprep.subr.mxu0 0.0
    %245 = vmatpush1.msra.mxu0 %v224
    %246 = vmatprep.subr.mxu0 0.0
    %247 = vmatpush1.msra.mxu0 %v225
    %248 = vmatprep.subr.mxu0 0.0
    %249 = vmatpush1.msra.mxu0 %v226
    %250 = vmatprep.subr.mxu0 0.0
    %251 = vmatpush1.msra.mxu0 %v227
    %252 = vmatprep.subr.mxu0 0.0
    %253 = vmatpush1.msra.mxu0 %v228
    %254 = vmatprep.subr.mxu0 0.0
    %255 = vmatpush1.msra.mxu0 %v229
    %256 = vmatprep.subr.mxu0 0.0
    %257 = vmatpush1.msra.mxu0 %v230
    %258 = vmatprep.subr.mxu0 0.0
    %259 = vmatpush1.msra.mxu0 0.0
    %260 = vmatprep.subr.mxu0 0.0
    %261 = vmatpush1.msra.mxu0 0.0
    %262 = vmatprep.subr.mxu0 0.0
    %263 = vmatpush1.msra.mxu0 0.0
    %264 = vmatprep.subr.mxu0 0.0
    %265 = vmatpush1.msra.mxu0 0.0
    %266 = vmatprep.subr.mxu0 0.0
    %267 = vmatpush1.msra.mxu0 0.0
    %268 = vmatprep.subr.mxu0 0.0
    %269 = vmatpush1.msra.mxu0 0.0
    %270 = vmatprep.subr.mxu0 0.0
    %271 = vmatpush1.msra.mxu0 0.0
    %272 = vmatprep.subr.mxu0 0.0
    %273 = vmatpush1.msra.mxu0 0.0
    %274 = vmatprep.subr.mxu0 0.0
    %275 = vmatpush1.msra.mxu0 0.0
    %276 = vmatprep.subr.mxu0 0.0
    %277 = vmatpush1.msra.mxu0 0.0
    %278 = vmatprep.subr.mxu0 0.0
    %279 = vmatpush1.msra.mxu0 0.0
    %280 = vmatprep.subr.mxu0 0.0
    %281 = vmatpush1.msra.mxu0 0.0
    %282 = vmatprep.subr.mxu0 0.0
    %283 = vmatpush1.msra.mxu0 0.0
    %284 = vmatprep.subr.mxu0 0.0
    %285 = vmatpush1.msra.mxu0 0.0
    %286 = vmatprep.subr.mxu0 0.0
    %287 = vmatpush1.msra.mxu0 0.0
    %288 = vmatprep.subr.mxu0 0.0
    %289 = vmatpush1.msra.mxu0 0.0
    %290 = vmatprep.subr.mxu0 0.0
    %291 = vmatpush1.msra.mxu0 0.0
    %292 = vmatprep.subr.mxu0 0.0
    %293 = vmatpush1.msra.mxu0 0.0
    %294 = vmatprep.subr.mxu0 0.0
    %295 = vmatpush1.msra.mxu0 0.0
    %296 = vmatprep.subr.mxu0 0.0
    %297 = vmatpush1.msra.mxu0 0.0
    %298 = vmatprep.subr.mxu0 0.0
    %299 = vmatpush1.msra.mxu0 0.0
    %300 = vmatprep.subr.mxu0 0.0
    %301 = vmatpush1.msra.mxu0 0.0
    %302 = vmatprep.subr.mxu0 0.0
    %303 = vmatpush1.msra.mxu0 0.0
    %304 = vmatprep.subr.mxu0 0.0
    %305 = vmatpush1.msra.mxu0 0.0
    %306 = vmatprep.mubr.f32.mxu0 0.0
    %307 = vmatmul.mubr.f32.gmra.mrb[0].mxu0 %v240
    %v308 = vpop.f32.mrb[0].mxu0
    %v309 = vadd.f32 %v236, %v308
    %v310 = vpop.f32.mrb[0].mxu0
    %311 = vdwg.mxu0
    %v312 = vmax.f32 %v309, 0.0
    %v313 = vld [vmem:[%s7] sm:$0xff]
    %v314 = vld [vmem:[%s7 + $0x8] sm:$0xff]
    %v315 = vld [vmem:[%s7 + $0x10] sm:$0xff]
    %v316 = vld [vmem:[%s7 + $0x18] sm:$0xff]
    %v317 = vld [vmem:[%s8] sm:$0x1]
    %v319 = vlaneseq
    %v320 = vshrl.u32 %v319, 7
    %v321 = vsub.s32 0, %v320
    %v322 = vrot.slane %v317, %v321
    %v325 = vsel %vm54, %v312, 0
    %327 = vmatprep.subr.mxu0 0.0
    %328 = vmatpush1.msra.mxu0 %v313
    %329 = vmatprep.subr.mxu0 0.0
    %330 = vmatpush1.msra.mxu0 %v314
    %331 = vmatprep.subr.mxu0 0.0
    %332 = vmatpush1.msra.mxu0 %v315
    %333 = vmatprep.subr.mxu0 0.0
    %334 = vmatpush1.msra.mxu0 %v316
    %335 = vmatprep.subr.mxu0 0.0
    %336 = vmatpush1.msra.mxu0 0.0
    %337 = vmatprep.subr.mxu0 0.0
    %338 = vmatpush1.msra.mxu0 0.0
    %339 = vmatprep.subr.mxu0 0.0
    %340 = vmatpush1.msra.mxu0 0.0
    %341 = vmatprep.subr.mxu0 0.0
    %342 = vmatpush1.msra.mxu0 0.0
    %343 = vmatprep.subr.mxu0 0.0
    %344 = vmatpush1.msra.mxu0 0.0
    %345 = vmatprep.subr.mxu0 0.0
    %346 = vmatpush1.msra.mxu0 0.0
    %347 = vmatprep.subr.mxu0 0.0
    %348 = vmatpush1.msra.mxu0 0.0
    %349 = vmatprep.subr.mxu0 0.0
    %350 = vmatpush1.msra.mxu0 0.0
    %351 = vmatprep.subr.mxu0 0.0
    %352 = vmatpush1.msra.mxu0 0.0
    %353 = vmatprep.subr.mxu0 0.0
    %354 = vmatpush1.msra.mxu0 0.0
    %355 = vmatprep.subr.mxu0 0.0
    %356 = vmatpush1.msra.mxu0 0.0
    %357 = vmatprep.subr.mxu0 0.0
    %358 = vmatpush1.msra.mxu0 0.0
    %359 = vmatprep.subr.mxu0 0.0
    %360 = vmatpush1.msra.mxu0 0.0
    %361 = vmatprep.subr.mxu0 0.0
    %362 = vmatpush1.msra.mxu0 0.0
    %363 = vmatprep.subr.mxu0 0.0
    %364 = vmatpush1.msra.mxu0 0.0
    %365 = vmatprep.subr.mxu0 0.0
    %366 = vmatpush1.msra.mxu0 0.0
    %367 = vmatprep.subr.mxu0 0.0
    %368 = vmatpush1.msra.mxu0 0.0
    %369 = vmatprep.subr.mxu0 0.0
    %370 = vmatpush1.msra.mxu0 0.0
    %371 = vmatprep.subr.mxu0 0.0
    %372 = vmatpush1.msra.mxu0 0.0
    %373 = vmatprep.subr.mxu0 0.0
    %374 = vmatpush1.msra.mxu0 0.0
    %375 = vmatprep.subr.mxu0 0.0
    %376 = vmatpush1.msra.mxu0 0.0
    %377 = vmatprep.subr.mxu0 0.0
    %378 = vmatpush1.msra.mxu0 0.0
    %379 = vmatprep.subr.mxu0 0.0
    %380 = vmatpush1.msra.mxu0 0.0
    %381 = vmatprep.subr.mxu0 0.0
    %382 = vmatpush1.msra.mxu0 0.0
    %383 = vmatprep.subr.mxu0 0.0
    %384 = vmatpush1.msra.mxu0 0.0
    %385 = vmatprep.subr.mxu0 0.0
    %386 = vmatpush1.msra.mxu0 0.0
    %387 = vmatprep.subr.mxu0 0.0
    %388 = vmatpush1.msra.mxu0 0.0
    %389 = vmatprep.subr.mxu0 0.0
    %390 = vmatpush1.msra.mxu0 0.0
    %391 = vmatprep.mubr.f32.mxu0 0.0
    %392 = vmatmul.mubr.f32.gmra.mrb[0].mxu0 %v325
    %v393 = vpop.f32.mrb[0].mxu0
    %v394 = vadd.f32 %v322, %v393
    %v395 = vpop.f32.mrb[0].mxu0
    %396 = vdwg.mxu0
    %v397 = vmax.f32 %v394, 0.0
    %v398 = vld [vmem:[%s9] sm:$0xff]
    %v399 = vld [vmem:[%s9 + $0x8] sm:$0xff]
    %v400 = vld [vmem:[%s10] sm:$0x1]
    %v402 = vlaneseq
    %v403 = vshrl.u32 %v402, 7
    %v404 = vsub.s32 0, %v403
    %v405 = vrot.slane %v400, %v404
    %vm407 = vcmask 130048
    %v409 = vsel %vm407, %v397, 0
    %411 = vmatprep.subr.mxu0 0.0
    %412 = vmatpush1.msra.mxu0 %v398
    %413 = vmatprep.subr.mxu0 0.0
    %414 = vmatpush1.msra.mxu0 %v399
    %415 = vmatprep.subr.mxu0 0.0
    %416 = vmatpush1.msra.mxu0 0.0
    %417 = vmatprep.subr.mxu0 0.0
    %418 = vmatpush1.msra.mxu0 0.0
    %419 = vmatprep.subr.mxu0 0.0
    %420 = vmatpush1.msra.mxu0 0.0
    %421 = vmatprep.subr.mxu0 0.0
    %422 = vmatpush1.msra.mxu0 0.0
    %423 = vmatprep.subr.mxu0 0.0
    %424 = vmatpush1.msra.mxu0 0.0
    %425 = vmatprep.subr.mxu0 0.0
    %426 = vmatpush1.msra.mxu0 0.0
    %427 = vmatprep.subr.mxu0 0.0
    %428 = vmatpush1.msra.mxu0 0.0
    %429 = vmatprep.subr.mxu0 0.0
    %430 = vmatpush1.msra.mxu0 0.0
    %431 = vmatprep.subr.mxu0 0.0
    %432 = vmatpush1.msra.mxu0 0.0
    %433 = vmatprep.subr.mxu0 0.0
    %434 = vmatpush1.msra.mxu0 0.0
    %435 = vmatprep.subr.mxu0 0.0
    %436 = vmatpush1.msra.mxu0 0.0
    %437 = vmatprep.subr.mxu0 0.0
    %438 = vmatpush1.msra.mxu0 0.0
    %439 = vmatprep.subr.mxu0 0.0
    %440 = vmatpush1.msra.mxu0 0.0
    %441 = vmatprep.subr.mxu0 0.0
    %442 = vmatpush1.msra.mxu0 0.0
    %443 = vmatprep.subr.mxu0 0.0
    %444 = vmatpush1.msra.mxu0 0.0
    %445 = vmatprep.subr.mxu0 0.0
    %446 = vmatpush1.msra.mxu0 0.0
    %447 = vmatprep.subr.mxu0 0.0
    %448 = vmatpush1.msra.mxu0 0.0
    %449 = vmatprep.subr.mxu0 0.0
    %450 = vmatpush1.msra.mxu0 0.0
    %451 = vmatprep.subr.mxu0 0.0
    %452 = vmatpush1.msra.mxu0 0.0
    %453 = vmatprep.subr.mxu0 0.0
    %454 = vmatpush1.msra.mxu0 0.0
    %455 = vmatprep.subr.mxu0 0.0
    %456 = vmatpush1.msra.mxu0 0.0
    %457 = vmatprep.subr.mxu0 0.0
    %458 = vmatpush1.msra.mxu0 0.0
    %459 = vmatprep.subr.mxu0 0.0
    %460 = vmatpush1.msra.mxu0 0.0
    %461 = vmatprep.subr.mxu0 0.0
    %462 = vmatpush1.msra.mxu0 0.0
    %463 = vmatprep.subr.mxu0 0.0
    %464 = vmatpush1.msra.mxu0 0.0
    %465 = vmatprep.subr.mxu0 0.0
    %466 = vmatpush1.msra.mxu0 0.0
    %467 = vmatprep.subr.mxu0 0.0
    %468 = vmatpush1.msra.mxu0 0.0
    %469 = vmatprep.subr.mxu0 0.0
    %470 = vmatpush1.msra.mxu0 0.0
    %471 = vmatprep.subr.mxu0 0.0
    %472 = vmatpush1.msra.mxu0 0.0
    %473 = vmatprep.subr.mxu0 0.0
    %474 = vmatpush1.msra.mxu0 0.0
    %475 = vmatprep.mubr.f32.mxu0 0.0
    %476 = vmatmul.mubr.f32.gmra.mrb[0].mxu0 %v409
    %v477 = vpop.f32.mrb[0].mxu0
    %v478 = vadd.f32 %v405, %v477
    %v479 = vpop.f32.mrb[0].mxu0
    %480 = vdwg.mxu0
    %481 = vst [vmem:[#allocation2] sm:$0xff] %v478
    %482 = vmax.xlane.f32.xlu0 %v478
    %v483 = vpop.xlane.xlu0 %482
    %v484 = vsub.f32 %v478, %v483
    %v485 = vmul.f32 %v484, 1.442695
    %v486 = vpow.pop %v485
    %487 = vadd.xlane.f32.xlu0 %v486
    %v488 = vpop.xlane.xlu0 %487
    %v489 = vrcp.pop %v488
    %v490 = vmul.f32 %v486, %v489
    %491 = vst [vmem:[#allocation4] sm:$0xff] %v490
    // Predicated region
    $region46: #{tpu_custom_call.1} parent=1 // pred_check
      _
    $region47: #{tpu_custom_call.1} parent=1 // pred_check_branch
      %493 = sbr.rel (0) target = $region49
    $region48: #{tpu_custom_call.1} parent=1 // pred_region
      %s495 = ssub.s32 128, 128
      %496 = vsyncadd [#allocation3], %s495
      %s498 = sshll.u32 [#allocation2], 4
      %s499 = int_to_ptr.vmem [resolvable:$true] %s498
      %501 = dma.vmem_to_hbm [thread:$0]  %s499, 128, %s11, [#allocation3]
    $region49: #{tpu_custom_call.1} parent=1 // pred_fallthru
      _
    // Predicated region
    $region50: #{tpu_custom_call.1} parent=1 // pred_check
      _
    $region51: #{tpu_custom_call.1} parent=1 // pred_check_branch
      %503 = sbr.rel (0) target = $region53
    $region52: #{tpu_custom_call.1} parent=1 // pred_region
      %s505 = ssub.s32 128, 128
      %506 = vsyncadd [#allocation5], %s505
      %s508 = sshll.u32 [#allocation4], 4
      %s509 = int_to_ptr.vmem [resolvable:$true] %s508
      %511 = dma.vmem_to_hbm [thread:$0]  %s509, 128, %s12, [#allocation5]
    $region53: #{tpu_custom_call.1} parent=1 // pred_fallthru
      _
    // Predicated region
    $region54: #{tpu_custom_call.1} parent=1 // pred_check
      _
    $region55: #{tpu_custom_call.1} parent=1 // pred_check_branch
      %513 = sbr.rel (0) target = $region57
    $region56: #{tpu_custom_call.1} parent=1 // pred_region
      %514 = dma.done [#allocation3], 128
    $region57: #{tpu_custom_call.1} parent=1 // pred_fallthru
      _
    // Predicated region
    $region58: #{tpu_custom_call.1} parent=1 // pred_check
      _
    $region59: #{tpu_custom_call.1} parent=1 // pred_check_branch
      %516 = sbr.rel (0) target = $region61
    $region60: #{tpu_custom_call.1} parent=1 // pred_region
      %517 = dma.done [#allocation5], 128
    $region61: #{tpu_custom_call.1} parent=1 // pred_fallthru
      _
    %518 = vsyncpa [#allocation3], 1
    %519 = vsyncpa [#allocation5], 1

</llo_original>
